<compile_context>
chip_gen: v6e
topology: v6e:2x2x1
jax: 0.10.0
libtpu: 0.0.40
codegen_flags: <defaults>
</compile_context>

<pallas_src>
import numpy as np
import jax
import jax.numpy as jnp
from jax.experimental import pallas as pl
from jax.experimental.pallas import tpu as pltpu

C = 8            # in_channels == out_channels (== W, required by expand_as)
H = 8
W = 8
KH = KW = 7
PAD = 3
CHW = C * H * W  # 512
CW = C * W       # 64

# The expand_as semantics (s2/s6 indexed by the last spatial dim) only
# type-check because the channel count equals the spatial width.
assert C == W, "expand_as semantics of this op chain require C == W"


def model_kernel(x_ref, m_ref, brow_ref, ssum_ref, out_ref):
    # x_ref:    (1, CHW)     raw input row (relu applied here; zero padding is
    #                        folded into the constant matrix since relu(0)=0)
    # m_ref:    (CHW, 2*CW)  Toeplitz-folded constants:
    #                          cols [0,  CW): colsum2[c,w]   ((c,w) flat, c-major)
    #                          cols [CW,2CW): s2[w] tiled per (c,w) lane
    # brow_ref: (1, 2*CW)    bias terms for the two halves (H*b and H*W*b)
    # ssum_ref: (CW, C)      constant segment-sum matrix  delta(c, c')
    # out_ref:  (C*H, W)     v7 flattened; every row equals the s6 lane row
    xrow = jnp.maximum(x_ref[...], 0.0)                                  # relu(x)

    # One MXU matmul produces colsum2 AND the tiled s2 row (2 halves of t).
    t = jnp.dot(xrow, m_ref[...], preferred_element_type=jnp.float32)
    t = t + brow_ref[...]                                                # (1, 128)

    colsum2 = t[:, :CW]        # (1, 64)  colsum2[c,w], c-major
    s2_tiled = t[:, CW:]       # (1, 64)  s2[w] repeated for every c  (C == W)

    # s6[c] = sum_w colsum2[c,w] * s2[w]  -> tiny segment-sum matmul (K=64, N=8)
    prod = colsum2 * s2_tiled                                            # (1, 64)
    s6 = jnp.dot(prod, ssum_ref[...], preferred_element_type=jnp.float32)  # (1, C)

    # v7[n,c,h,w] = s6[w]: emit the broadcast directly (cheap sublane broadcast).
    out_ref[...] = jnp.broadcast_to(s6, (C * H, W)).astype(out_ref.dtype)


@jax.jit
def model_forward(x, m_big, bias_row, ssum):
    """x: (1, C, H, W) f32; remaining args: init-time constants from
    prepare_constants().  The jitted graph is one pallas_call plus two
    bitcast-only reshapes."""
    xrow = x.reshape(1, CHW)                       # metadata-only reshape
    out = pl.pallas_call(
        model_kernel,
        out_shape=jax.ShapeDtypeStruct((C * H, W), jnp.float32),
        in_specs=[
            pl.BlockSpec(memory_space=pltpu.MemorySpace.VMEM),
            pl.BlockSpec(memory_space=pltpu.MemorySpace.VMEM),
            pl.BlockSpec(memory_space=pltpu.MemorySpace.VMEM),
            pl.BlockSpec(memory_space=pltpu.MemorySpace.VMEM),
        ],
        out_specs=pl.BlockSpec(memory_space=pltpu.MemorySpace.VMEM),
    )(xrow, m_big, bias_row, ssum)
    return out.reshape(1, C, H, W)                 # metadata-only reshape


def prepare_constants(weight, bias):
    """One-time (init-time) weight transform; not in the forward hot path.

    Builds:
      m_big   (CHW, 2*CW): columns [0,CW)  -> colsum2[(c,w)] linear map
                            columns [CW,..) -> s2[w] (tiled over c) linear map
      bias_row (1, 2*CW):   H*bias[c]  /  H*W*bias[w]
      ssum     (CW, C):     segment-sum (delta(c, c'))
    """
    Wt = np.asarray(weight, dtype=np.float64)       # (C, C, KH, KW)
    b = np.asarray(bias, dtype=np.float64)          # (C,)

    # A[kh, h] = 1 if unpadded input row h is covered by kernel row kh for some
    # output row oh in [0, H)  (i.e. h == oh + kh - PAD).  This folds both the
    # sum over output rows and the zero padding in h.
    A = np.zeros((KH, H))
    for kh in range(KH):
        for h in range(H):
            oh = h - kh + PAD
            if 0 <= oh < H:
                A[kh, h] = 1.0

    # G[(ci,h,u), (co,ow)]:  colsum2[co,ow] = H*b[co] + sum relu(x)[ci,h,u]*G[...]
    # Width zero-padding is folded via the valid-u test (Toeplitz structure).
    G = np.zeros((C, H, W, C, W))
    for co in range(C):
        for ow in range(W):
            for kh in range(KH):
                for kw in range(KW):
                    u = ow + kw - PAD
                    if 0 <= u < W:
                        G[:, :, u, co, ow] += Wt[co, :, kh, kw][:, None] * A[kh][None, :]
    G = G.reshape(CHW, CW)

    # s2[w] = sum_ow colsum2[w, ow]; tile its linear map so lane (c*W + w)
    # holds the s2[w] column (valid because C == W).
    Gs = G.reshape(CHW, C, W).sum(axis=2)           # (CHW, C)
    Gt = np.tile(Gs, (1, C))                        # (CHW, CW), col c*W+w -> Gs[:, w]

    m_big = np.concatenate([G, Gt], axis=1).astype(np.float32)          # (512, 128)

    bias_row = np.concatenate([np.repeat(H * b, W),        # H*bias[c] at lane c*W+w
                               np.tile(H * W * b, C)])     # H*W*bias[w]
    bias_row = bias_row.astype(np.float32).reshape(1, 2 * CW)

    ssum = np.repeat(np.eye(C), W, axis=0).astype(np.float32)           # (64, 8)

    return jnp.asarray(m_big), jnp.asarray(bias_row), jnp.asarray(ssum)


def reference(x, weight, bias):
    """Pure-JAX reference of the same (shape-valid) op chain."""
    def conv(v):
        y = jax.lax.conv_general_dilated(
            v, weight, window_strides=(1, 1),
            padding=[(PAD, PAD), (PAD, PAD)],
            dimension_numbers=("NCHW", "OIHW", "NCHW"))
        return y + bias.reshape(1, -1, 1, 1)

    v1 = jnp.maximum(x, 0.0)
    v2 = conv(v1)
    s2 = v2.sum(axis=-1).sum(axis=-1)                        # (1, C)
    v3 = jnp.broadcast_to(s2.reshape(1, 1, 1, C), v1.shape)  # expand_as(v1)
    v4 = jnp.maximum(v1, 0.0)
    v5 = conv(v4)
    v6 = v5 * v3
    s6 = v6.sum(axis=-1).sum(axis=-1)                        # (1, C)
    v7 = jnp.broadcast_to(s6.reshape(1, 1, 1, C), v1.shape)
    return v7


if __name__ == "__main__":
    key = jax.random.PRNGKey(0)
    kx, kw, kb = jax.random.split(key, 3)

    x1 = jax.random.normal(kx, (1, C, H, W), dtype=jnp.float32)

    # Deterministic Conv2d-style init (uniform(-1/sqrt(fan_in), 1/sqrt(fan_in)))
    fan_in = C * KH * KW
    bound = 1.0 / (fan_in ** 0.5)
    conv_weight = jax.random.uniform(kw, (C, C, KH, KW), jnp.float32, -bound, bound)
    conv_bias = jax.random.uniform(kb, (C,), jnp.float32, -bound, bound)

    # Init-time constant folding (would be done once per set of weights).
    m_big, bias_row, ssum = prepare_constants(conv_weight, conv_bias)

    out = model_forward(x1, m_big, bias_row, ssum)
    out = jax.block_until_ready(out)

    ref = reference(x1, conv_weight, conv_bias)
    assert out.shape == (1, C, H, W), out.shape
    if not jnp.allclose(out, ref, rtol=1e-3, atol=1e-2):
        raise AssertionError("Pallas kernel result does not match reference")
    print("KERNEL_OK")
</pallas_src>

<mosaic_0001>
module attributes {stable_mosaic.version = 11 : i64} {
  func.func @model_kernel(%arg0: memref<1x512xf32, #tpu.memory_space<vmem>>, %arg1: memref<512x128xf32, #tpu.memory_space<vmem>>, %arg2: memref<1x128xf32, #tpu.memory_space<vmem>>, %arg3: memref<64x8xf32, #tpu.memory_space<vmem>>, %arg4: memref<64x8xf32, #tpu.memory_space<vmem>>) attributes {dimension_semantics = [], scalar_prefetch = 0 : i64, scratch_operands = 0 : i64, tpu.core_type = #tpu.core_type<tc>} {
    %c0 = arith.constant 0 : index
    %c0_0 = arith.constant 0 : index
    %0 = vector.load %arg0[%c0, %c0_0] : memref<1x512xf32, #tpu.memory_space<vmem>>, vector<1x512xf32>
    %cst = arith.constant 0.000000e+00 : f32
    %1 = vector.broadcast %cst : f32 to vector<1x512xf32>
    %2 = arith.maximumf %0, %1 : vector<1x512xf32>
    %c0_1 = arith.constant 0 : index
    %c0_2 = arith.constant 0 : index
    %3 = vector.load %arg1[%c0_1, %c0_2] : memref<512x128xf32, #tpu.memory_space<vmem>>, vector<512x128xf32>
    %cst_3 = arith.constant dense<0.000000e+00> : vector<1x128xf32>
    %4 = tpu.matmul %2, %3, %cst_3 {dimension_numbers = #tpu.dot_dimension_numbers<[1], [0], [0], [1], [0, 0, 1, 1], [], []>} : vector<1x512xf32>, vector<512x128xf32>, vector<1x128xf32> -> vector<1x128xf32>
    %c0_4 = arith.constant 0 : index
    %c0_5 = arith.constant 0 : index
    %5 = vector.load %arg2[%c0_4, %c0_5] : memref<1x128xf32, #tpu.memory_space<vmem>>, vector<1x128xf32>
    %6 = arith.addf %4, %5 : vector<1x128xf32>
    %7 = vector.extract_strided_slice %6 {offsets = [0, 0], sizes = [1, 64], strides = [1, 1]} : vector<1x128xf32> to vector<1x64xf32>
    %8 = vector.extract_strided_slice %6 {offsets = [0, 64], sizes = [1, 64], strides = [1, 1]} : vector<1x128xf32> to vector<1x64xf32>
    %9 = arith.mulf %7, %8 : vector<1x64xf32>
    %c0_6 = arith.constant 0 : index
    %c0_7 = arith.constant 0 : index
    %10 = vector.load %arg3[%c0_6, %c0_7] : memref<64x8xf32, #tpu.memory_space<vmem>>, vector<64x8xf32>
    %cst_8 = arith.constant dense<0.000000e+00> : vector<1x8xf32>
    %11 = tpu.matmul %9, %10, %cst_8 {dimension_numbers = #tpu.dot_dimension_numbers<[1], [0], [0], [1], [0, 0, 1, 1], [], []>} : vector<1x64xf32>, vector<64x8xf32>, vector<1x8xf32> -> vector<1x8xf32>
    %12 = vector.shape_cast %11 : vector<1x8xf32> to vector<1x8xf32>
    %13 = vector.broadcast %12 : vector<1x8xf32> to vector<64x8xf32>
    %c0_9 = arith.constant 0 : index
    %c0_10 = arith.constant 0 : index
    %14 = vector.load %arg4[%c0_9, %c0_10] : memref<64x8xf32, #tpu.memory_space<vmem>>, vector<64x8xf32>
    tpu.vector_store %arg4[%c0_9, %c0_10], %13 {strides = array<i32>} : memref<64x8xf32, #tpu.memory_space<vmem>>, vector<64x8xf32>,
    return
  }
}

</mosaic_0001>

<llo_original>
// kernel: model_forward.1
$region0: #{model_forward.1}
  #allocation0 [shape = 'u32[]', space=smem, size = 0x4, offset = 0x4, fixed_abs, tag = 'smem constant byte address 0x4 - core index']
  #allocation1 [shape = 'u32[144,128]{1,0:T(1,128)}', space=vmem, size = 0x12000, scoped, tag = 'internal scratch']
  %s0 = inlined_call_operand.vmem [shape: f32[1,512], index: 0, kind: input, shape index: {}]
  %s1 = inlined_call_operand.hbm [shape: f32[512,128], index: 1, kind: input, shape index: {}]
  %s2 = inlined_call_operand.vmem [shape: f32[1,128], index: 2, kind: input, shape index: {}]
  %s3 = inlined_call_operand.vmem [shape: f32[64,8], index: 3, kind: input, shape index: {}]
  %s4 = inlined_call_operand.hbm [shape: f32[64,8], index: 4, kind: output, shape index: {}]
  %s5 = sld [smem:[#allocation0]]
  $region30: #{model_forward.1} parent=0
    _
  %s7 = ssub.s32 1, %s5
  %s8 = scalar_select 0, %s7, %s5
  $region1: #{model_forward.1} parent=0
    #allocation2 [shape = 'u8[262144]{0}', space=vmem, size = 0x40000, scoped, tag = 'input window, operand 1, single buffered']
    #allocation3 [shape = 's32[1]{0}', space=sflag, size = 0x4, scoped, tag = 'scoped memory for model_forward.1']
    #allocation4 [shape = 's32[1]{0}', space=sflag, size = 0x4, scoped, tag = 'scoped memory for model_forward.1']
    #allocation5 [shape = 'u8[32768]{0}', space=vmem, size = 0x8000, scoped, tag = 'output window, operand 0, single buffered']
    %9 = vsyncpa [#allocation3], 0
    %10 = vsyncpa [#allocation4], 0
    // Predicated region
    $region2: #{model_forward.1} parent=1 // pred_check
      _
    $region3: #{model_forward.1} parent=1 // pred_check_branch
      %12 = sbr.rel (0) target = $region5
    $region4: #{model_forward.1} parent=1 // pred_region
      _
    $region5: #{model_forward.1} parent=1 // pred_fallthru
      _
    // Predicated region
    $region6: #{model_forward.1} parent=1 // pred_check
      _
    $region7: #{model_forward.1} parent=1 // pred_check_branch
      %14 = sbr.rel (0) target = $region9
    $region8: #{model_forward.1} parent=1 // pred_region
      %s16 = ssub.s32 8192, 8192
      %17 = vsyncadd [#allocation3], %s16
      %s18 = sshll.u32 [#allocation2], 4
      %s19 = int_to_ptr.vmem [resolvable:$true] %s18
      %24 = dma.hbm_to_vmem [thread:$0]  %s1, 8192, %s19, [#allocation3], 128, 128, 8
    $region9: #{model_forward.1} parent=1 // pred_fallthru
      _
    // Predicated region
    $region10: #{model_forward.1} parent=1 // pred_check
      _
    $region11: #{model_forward.1} parent=1 // pred_check_branch
      %26 = sbr.rel (0) target = $region13
    $region12: #{model_forward.1} parent=1 // pred_region
      _
    $region13: #{model_forward.1} parent=1 // pred_fallthru
      _
    // Predicated region
    $region14: #{model_forward.1} parent=1 // pred_check
      _
    $region15: #{model_forward.1} parent=1 // pred_check_branch
      %28 = sbr.rel (0) target = $region17
    $region16: #{model_forward.1} parent=1 // pred_region
      _
    $region17: #{model_forward.1} parent=1 // pred_fallthru
      _
    // Predicated region
    $region18: #{model_forward.1} parent=1 // pred_check
      _
    $region19: #{model_forward.1} parent=1 // pred_check_branch
      %30 = sbr.rel (0) target = $region21
    $region20: #{model_forward.1} parent=1 // pred_region
      %31 = dma.done [#allocation3], 8192
    $region21: #{model_forward.1} parent=1 // pred_fallthru
      _
    %v32 = vld [vmem:[%s0] sm:$0xf]
    %v33 = vmax.f32 %v32, 0.0
    %v34 = vld [vmem:[#allocation2] sm:$0xff]
    %v35 = vld [vmem:[#allocation2 + $0x8] sm:$0xff]
    %v36 = vld [vmem:[#allocation2 + $0x10] sm:$0xff]
    %v37 = vld [vmem:[#allocation2 + $0x18] sm:$0xff]
    %v38 = vld [vmem:[#allocation2 + $0x20] sm:$0xff]
    %v39 = vld [vmem:[#allocation2 + $0x28] sm:$0xff]
    %v40 = vld [vmem:[#allocation2 + $0x30] sm:$0xff]
    %v41 = vld [vmem:[#allocation2 + $0x38] sm:$0xff]
    %v42 = vld [vmem:[#allocation2 + $0x40] sm:$0xff]
    %v43 = vld [vmem:[#allocation2 + $0x48] sm:$0xff]
    %v44 = vld [vmem:[#allocation2 + $0x50] sm:$0xff]
    %v45 = vld [vmem:[#allocation2 + $0x58] sm:$0xff]
    %v46 = vld [vmem:[#allocation2 + $0x60] sm:$0xff]
    %v47 = vld [vmem:[#allocation2 + $0x68] sm:$0xff]
    %v48 = vld [vmem:[#allocation2 + $0x70] sm:$0xff]
    %v49 = vld [vmem:[#allocation2 + $0x78] sm:$0xff]
    %v50 = vld [vmem:[#allocation2 + $0x80] sm:$0xff]
    %v51 = vld [vmem:[#allocation2 + $0x88] sm:$0xff]
    %v52 = vld [vmem:[#allocation2 + $0x90] sm:$0xff]
    %v53 = vld [vmem:[#allocation2 + $0x98] sm:$0xff]
    %v54 = vld [vmem:[#allocation2 + $0xa0] sm:$0xff]
    %v55 = vld [vmem:[#allocation2 + $0xa8] sm:$0xff]
    %v56 = vld [vmem:[#allocation2 + $0xb0] sm:$0xff]
    %v57 = vld [vmem:[#allocation2 + $0xb8] sm:$0xff]
    %v58 = vld [vmem:[#allocation2 + $0xc0] sm:$0xff]
    %v59 = vld [vmem:[#allocation2 + $0xc8] sm:$0xff]
    %v60 = vld [vmem:[#allocation2 + $0xd0] sm:$0xff]
    %v61 = vld [vmem:[#allocation2 + $0xd8] sm:$0xff]
    %v62 = vld [vmem:[#allocation2 + $0xe0] sm:$0xff]
    %v63 = vld [vmem:[#allocation2 + $0xe8] sm:$0xff]
    %v64 = vld [vmem:[#allocation2 + $0xf0] sm:$0xff]
    %v65 = vld [vmem:[#allocation2 + $0xf8] sm:$0xff]
    %v66 = vld [vmem:[#allocation2 + $0x100] sm:$0xff]
    %v67 = vld [vmem:[#allocation2 + $0x108] sm:$0xff]
    %v68 = vld [vmem:[#allocation2 + $0x110] sm:$0xff]
    %v69 = vld [vmem:[#allocation2 + $0x118] sm:$0xff]
    %v70 = vld [vmem:[#allocation2 + $0x120] sm:$0xff]
    %v71 = vld [vmem:[#allocation2 + $0x128] sm:$0xff]
    %v72 = vld [vmem:[#allocation2 + $0x130] sm:$0xff]
    %v73 = vld [vmem:[#allocation2 + $0x138] sm:$0xff]
    %v74 = vld [vmem:[#allocation2 + $0x140] sm:$0xff]
    %v75 = vld [vmem:[#allocation2 + $0x148] sm:$0xff]
    %v76 = vld [vmem:[#allocation2 + $0x150] sm:$0xff]
    %v77 = vld [vmem:[#allocation2 + $0x158] sm:$0xff]
    %v78 = vld [vmem:[#allocation2 + $0x160] sm:$0xff]
    %v79 = vld [vmem:[#allocation2 + $0x168] sm:$0xff]
    %v80 = vld [vmem:[#allocation2 + $0x170] sm:$0xff]
    %v81 = vld [vmem:[#allocation2 + $0x178] sm:$0xff]
    %v82 = vld [vmem:[#allocation2 + $0x180] sm:$0xff]
    %v83 = vld [vmem:[#allocation2 + $0x188] sm:$0xff]
    %v84 = vld [vmem:[#allocation2 + $0x190] sm:$0xff]
    %v85 = vld [vmem:[#allocation2 + $0x198] sm:$0xff]
    %v86 = vld [vmem:[#allocation2 + $0x1a0] sm:$0xff]
    %v87 = vld [vmem:[#allocation2 + $0x1a8] sm:$0xff]
    %v88 = vld [vmem:[#allocation2 + $0x1b0] sm:$0xff]
    %v89 = vld [vmem:[#allocation2 + $0x1b8] sm:$0xff]
    %v90 = vld [vmem:[#allocation2 + $0x1c0] sm:$0xff]
    %v91 = vld [vmem:[#allocation2 + $0x1c8] sm:$0xff]
    %v92 = vld [vmem:[#allocation2 + $0x1d0] sm:$0xff]
    %v93 = vld [vmem:[#allocation2 + $0x1d8] sm:$0xff]
    %v94 = vld [vmem:[#allocation2 + $0x1e0] sm:$0xff]
    %v95 = vld [vmem:[#allocation2 + $0x1e8] sm:$0xff]
    %v96 = vld [vmem:[#allocation2 + $0x1f0] sm:$0xff]
    %v97 = vld [vmem:[#allocation2 + $0x1f8] sm:$0xff]
    %v98 = vld [vmem:[%s2] sm:$0x1]
    %v100 = vlaneseq
    %v101 = vshrl.u32 %v100, 7
    %v102 = vsub.s32 0, %v101
    %v103 = vrot.slane %v33, %v102
    %v104 = vlaneseq
    %v105 = vshrl.u32 %v104, 7
    %v106 = vsub.s32 1, %v105
    %v107 = vrot.slane %v33, %v106
    %v108 = vlaneseq
    %v109 = vshrl.u32 %v108, 7
    %v110 = vsub.s32 2, %v109
    %v111 = vrot.slane %v33, %v110
    %v112 = vlaneseq
    %v113 = vshrl.u32 %v112, 7
    %v114 = vsub.s32 3, %v113
    %v115 = vrot.slane %v33, %v114
    %120 = vmatprep.subr.mxu0 0.0
    %121 = vmatpush1.msra.mxu0 %v49
    %122 = vmatprep.subr.mxu0 0.0
    %123 = vmatpush1.msra.mxu0 %v48
    %124 = vmatprep.subr.mxu0 0.0
    %125 = vmatpush1.msra.mxu0 %v47
    %126 = vmatprep.subr.mxu0 0.0
    %127 = vmatpush1.msra.mxu0 %v46
    %128 = vmatprep.subr.mxu0 0.0
    %129 = vmatpush1.msra.mxu0 %v45
    %130 = vmatprep.subr.mxu0 0.0
    %131 = vmatpush1.msra.mxu0 %v44
    %132 = vmatprep.subr.mxu0 0.0
    %133 = vmatpush1.msra.mxu0 %v43
    %134 = vmatprep.subr.mxu0 0.0
    %135 = vmatpush1.msra.mxu0 %v42
    %136 = vmatprep.subr.mxu0 0.0
    %137 = vmatpush1.msra.mxu0 %v41
    %138 = vmatprep.subr.mxu0 0.0
    %139 = vmatpush1.msra.mxu0 %v40
    %140 = vmatprep.subr.mxu0 0.0
    %141 = vmatpush1.msra.mxu0 %v39
    %142 = vmatprep.subr.mxu0 0.0
    %143 = vmatpush1.msra.mxu0 %v38
    %144 = vmatprep.subr.mxu0 0.0
    %145 = vmatpush1.msra.mxu0 %v37
    %146 = vmatprep.subr.mxu0 0.0
    %147 = vmatpush1.msra.mxu0 %v36
    %148 = vmatprep.subr.mxu0 0.0
    %149 = vmatpush1.msra.mxu0 %v35
    %150 = vmatprep.subr.mxu0 0.0
    %151 = vmatpush1.msra.mxu0 %v34
    %152 = vmatprep.subr.mxu0 0.0
    %153 = vmatpush2.msra.mxu0 %v65
    %154 = vmatprep.subr.mxu0 0.0
    %155 = vmatpush2.msra.mxu0 %v64
    %156 = vmatprep.subr.mxu0 0.0
    %157 = vmatpush2.msra.mxu0 %v63
    %158 = vmatprep.subr.mxu0 0.0
    %159 = vmatpush2.msra.mxu0 %v62
    %160 = vmatprep.subr.mxu0 0.0
    %161 = vmatpush2.msra.mxu0 %v61
    %162 = vmatprep.subr.mxu0 0.0
    %163 = vmatpush2.msra.mxu0 %v60
    %164 = vmatprep.subr.mxu0 0.0
    %165 = vmatpush2.msra.mxu0 %v59
    %166 = vmatprep.subr.mxu0 0.0
    %167 = vmatpush2.msra.mxu0 %v58
    %168 = vmatprep.subr.mxu0 0.0
    %169 = vmatpush2.msra.mxu0 %v57
    %170 = vmatprep.subr.mxu0 0.0
    %171 = vmatpush2.msra.mxu0 %v56
    %172 = vmatprep.subr.mxu0 0.0
    %173 = vmatpush2.msra.mxu0 %v55
    %174 = vmatprep.subr.mxu0 0.0
    %175 = vmatpush2.msra.mxu0 %v54
    %176 = vmatprep.subr.mxu0 0.0
    %177 = vmatpush2.msra.mxu0 %v53
    %178 = vmatprep.subr.mxu0 0.0
    %179 = vmatpush2.msra.mxu0 %v52
    %180 = vmatprep.subr.mxu0 0.0
    %181 = vmatpush2.msra.mxu0 %v51
    %182 = vmatprep.subr.mxu0 0.0
    %183 = vmatpush2.msra.mxu0 %v50
    %184 = vmatprep.mubr.f32.mxu0 %v107
    %185 = vmatmul.mubr.f32.gmra.mxu0 %v103
    %v186 = vpop.f32.mrf.mxu0
    %v187 = vadd.f32 %v98, %v186
    %v188 = vpop.f32.mrf.mxu0
    %189 = vdwg.mxu0
    %190 = vmatprep.subr.mxu0 0.0
    %191 = vmatpush1.msra.mxu0 %v81
    %192 = vmatprep.subr.mxu0 0.0
    %193 = vmatpush1.msra.mxu0 %v80
    %194 = vmatprep.subr.mxu0 0.0
    %195 = vmatpush1.msra.mxu0 %v79
    %196 = vmatprep.subr.mxu0 0.0
    %197 = vmatpush1.msra.mxu0 %v78
    %198 = vmatprep.subr.mxu0 0.0
    %199 = vmatpush1.msra.mxu0 %v77
    %200 = vmatprep.subr.mxu0 0.0
    %201 = vmatpush1.msra.mxu0 %v76
    %202 = vmatprep.subr.mxu0 0.0
    %203 = vmatpush1.msra.mxu0 %v75
    %204 = vmatprep.subr.mxu0 0.0
    %205 = vmatpush1.msra.mxu0 %v74
    %206 = vmatprep.subr.mxu0 0.0
    %207 = vmatpush1.msra.mxu0 %v73
    %208 = vmatprep.subr.mxu0 0.0
    %209 = vmatpush1.msra.mxu0 %v72
    %210 = vmatprep.subr.mxu0 0.0
    %211 = vmatpush1.msra.mxu0 %v71
    %212 = vmatprep.subr.mxu0 0.0
    %213 = vmatpush1.msra.mxu0 %v70
    %214 = vmatprep.subr.mxu0 0.0
    %215 = vmatpush1.msra.mxu0 %v69
    %216 = vmatprep.subr.mxu0 0.0
    %217 = vmatpush1.msra.mxu0 %v68
    %218 = vmatprep.subr.mxu0 0.0
    %219 = vmatpush1.msra.mxu0 %v67
    %220 = vmatprep.subr.mxu0 0.0
    %221 = vmatpush1.msra.mxu0 %v66
    %222 = vmatprep.subr.mxu0 0.0
    %223 = vmatpush2.msra.mxu0 %v97
    %224 = vmatprep.subr.mxu0 0.0
    %225 = vmatpush2.msra.mxu0 %v96
    %226 = vmatprep.subr.mxu0 0.0
    %227 = vmatpush2.msra.mxu0 %v95
    %228 = vmatprep.subr.mxu0 0.0
    %229 = vmatpush2.msra.mxu0 %v94
    %230 = vmatprep.subr.mxu0 0.0
    %231 = vmatpush2.msra.mxu0 %v93
    %232 = vmatprep.subr.mxu0 0.0
    %233 = vmatpush2.msra.mxu0 %v92
    %234 = vmatprep.subr.mxu0 0.0
    %235 = vmatpush2.msra.mxu0 %v91
    %236 = vmatprep.subr.mxu0 0.0
    %237 = vmatpush2.msra.mxu0 %v90
    %238 = vmatprep.subr.mxu0 0.0
    %239 = vmatpush2.msra.mxu0 %v89
    %240 = vmatprep.subr.mxu0 0.0
    %241 = vmatpush2.msra.mxu0 %v88
    %242 = vmatprep.subr.mxu0 0.0
    %243 = vmatpush2.msra.mxu0 %v87
    %244 = vmatprep.subr.mxu0 0.0
    %245 = vmatpush2.msra.mxu0 %v86
    %246 = vmatprep.subr.mxu0 0.0
    %247 = vmatpush2.msra.mxu0 %v85
    %248 = vmatprep.subr.mxu0 0.0
    %249 = vmatpush2.msra.mxu0 %v84
    %250 = vmatprep.subr.mxu0 0.0
    %251 = vmatpush2.msra.mxu0 %v83
    %252 = vmatprep.subr.mxu0 0.0
    %253 = vmatpush2.msra.mxu0 %v82
    %254 = vmatprep.mubr.f32.mxu0 %v115
    %255 = vmatmul.mubr.f32.gmra.mxu0 %v111
    %v256 = vpop.f32.mrf.mxu0
    %v257 = vadd.f32 %v187, %v256
    %v258 = vpop.f32.mrf.mxu0
    %259 = vdwg.mxu0
    %261 = vrot.lane.b32.xlu0 %v257, 64
    %v262 = vpop.permute.xlu0 %261
    %v264 = vmul.f32 %v257, %v262
    %v265 = vld [vmem:[%s3] sm:$0xff]
    %v266 = vld [vmem:[%s3 + $0x8] sm:$0xff]
    %v267 = vld [vmem:[%s3 + $0x10] sm:$0xff]
    %v268 = vld [vmem:[%s3 + $0x18] sm:$0xff]
    %v269 = vld [vmem:[%s3 + $0x20] sm:$0xff]
    %v270 = vld [vmem:[%s3 + $0x28] sm:$0xff]
    %v271 = vld [vmem:[%s3 + $0x30] sm:$0xff]
    %v272 = vld [vmem:[%s3 + $0x38] sm:$0xff]
    %vm273 = vcmask 523264
    %v275 = vsel %vm273, %v264, 0
    %277 = vmatprep.subr.mxu0 0.0
    %278 = vmatpush1.msra.mxu0 0.0
    %279 = vmatprep.subr.mxu0 0.0
    %280 = vmatpush1.msra.mxu0 0.0
    %281 = vmatprep.subr.mxu0 0.0
    %282 = vmatpush1.msra.mxu0 0.0
    %283 = vmatprep.subr.mxu0 0.0
    %284 = vmatpush1.msra.mxu0 0.0
    %285 = vmatprep.subr.mxu0 0.0
    %286 = vmatpush1.msra.mxu0 0.0
    %287 = vmatprep.subr.mxu0 0.0
    %288 = vmatpush1.msra.mxu0 0.0
    %289 = vmatprep.subr.mxu0 0.0
    %290 = vmatpush1.msra.mxu0 0.0
    %291 = vmatprep.subr.mxu0 0.0
    %292 = vmatpush1.msra.mxu0 0.0
    %293 = vmatprep.subr.mxu0 0.0
    %294 = vmatpush1.msra.mxu0 %v272
    %295 = vmatprep.subr.mxu0 0.0
    %296 = vmatpush1.msra.mxu0 %v271
    %297 = vmatprep.subr.mxu0 0.0
    %298 = vmatpush1.msra.mxu0 %v270
    %299 = vmatprep.subr.mxu0 0.0
    %300 = vmatpush1.msra.mxu0 %v269
    %301 = vmatprep.subr.mxu0 0.0
    %302 = vmatpush1.msra.mxu0 %v268
    %303 = vmatprep.subr.mxu0 0.0
    %304 = vmatpush1.msra.mxu0 %v267
    %305 = vmatprep.subr.mxu0 0.0
    %306 = vmatpush1.msra.mxu0 %v266
    %307 = vmatprep.subr.mxu0 0.0
    %308 = vmatpush1.msra.mxu0 %v265
    %309 = vmatprep.subr.mxu0 0.0
    %310 = vmatpush2.msra.mxu0 0.0
    %311 = vmatprep.subr.mxu0 0.0
    %312 = vmatpush2.msra.mxu0 0.0
    %313 = vmatprep.subr.mxu0 0.0
    %314 = vmatpush2.msra.mxu0 0.0
    %315 = vmatprep.subr.mxu0 0.0
    %316 = vmatpush2.msra.mxu0 0.0
    %317 = vmatprep.subr.mxu0 0.0
    %318 = vmatpush2.msra.mxu0 0.0
    %319 = vmatprep.subr.mxu0 0.0
    %320 = vmatpush2.msra.mxu0 0.0
    %321 = vmatprep.subr.mxu0 0.0
    %322 = vmatpush2.msra.mxu0 0.0
    %323 = vmatprep.subr.mxu0 0.0
    %324 = vmatpush2.msra.mxu0 0.0
    %325 = vmatprep.subr.mxu0 0.0
    %326 = vmatpush2.msra.mxu0 0.0
    %327 = vmatprep.subr.mxu0 0.0
    %328 = vmatpush2.msra.mxu0 0.0
    %329 = vmatprep.subr.mxu0 0.0
    %330 = vmatpush2.msra.mxu0 0.0
    %331 = vmatprep.subr.mxu0 0.0
    %332 = vmatpush2.msra.mxu0 0.0
    %333 = vmatprep.subr.mxu0 0.0
    %334 = vmatpush2.msra.mxu0 0.0
    %335 = vmatprep.subr.mxu0 0.0
    %336 = vmatpush2.msra.mxu0 0.0
    %337 = vmatprep.subr.mxu0 0.0
    %338 = vmatpush2.msra.mxu0 0.0
    %339 = vmatprep.subr.mxu0 0.0
    %340 = vmatpush2.msra.mxu0 0.0
    %341 = vmatprep.mubr.f32.mxu0 0.0
    %342 = vmatmul.mubr.f32.gmra.mxu0 %v275
    %v343 = vpop.f32.mrf.mxu0
    %v344 = vadd.f32 0.0, %v343
    %v345 = vpop.f32.mrf.mxu0
    %346 = vdwg.mxu0
    %v347 = vlaneseq
    %v348 = vshrl.u32 %v347, 7
    %v349 = vsub.s32 0, %v348
    %v350 = vrot.slane %v344, %v349
    %vm351 = vcmask 64512
    %352 = vst.msk [vmem:[#allocation5] sm:$0xff] %vm351, %v350
    %353 = vst.msk [vmem:[#allocation5 + $0x8] sm:$0xff] %vm351, %v350
    %354 = vst.msk [vmem:[#allocation5 + $0x10] sm:$0xff] %vm351, %v350
    %355 = vst.msk [vmem:[#allocation5 + $0x18] sm:$0xff] %vm351, %v350
    %356 = vst.msk [vmem:[#allocation5 + $0x20] sm:$0xff] %vm351, %v350
    %357 = vst.msk [vmem:[#allocation5 + $0x28] sm:$0xff] %vm351, %v350
    %358 = vst.msk [vmem:[#allocation5 + $0x30] sm:$0xff] %vm351, %v350
    %359 = vst.msk [vmem:[#allocation5 + $0x38] sm:$0xff] %vm351, %v350
    // Predicated region
    $region22: #{model_forward.1} parent=1 // pred_check
      _
    $region23: #{model_forward.1} parent=1 // pred_check_branch
      %361 = sbr.rel (0) target = $region25
    $region24: #{model_forward.1} parent=1 // pred_region
      %s363 = ssub.s32 1024, 1024
      %364 = vsyncadd [#allocation4], %s363
      %s365 = sshll.u32 [#allocation5], 4
      %s366 = int_to_ptr.vmem [resolvable:$true] %s365
      %371 = dma.vmem_to_hbm [thread:$0]  %s366, 1024, %s4, [#allocation4], 128, 128, 8
    $region25: #{model_forward.1} parent=1 // pred_fallthru
      _
    // Predicated region
    $region26: #{model_forward.1} parent=1 // pred_check
      _
    $region27: #{model_forward.1} parent=1 // pred_check_branch
      %373 = sbr.rel (0) target = $region29
    $region28: #{model_forward.1} parent=1 // pred_region
      %374 = dma.done [#allocation4], 1024
    $region29: #{model_forward.1} parent=1 // pred_fallthru
      _
    %375 = vsyncpa [#allocation3], 1
    %376 = vsyncpa [#allocation4], 1

</llo_original>
